<compile_context>
chip_gen: v5e
topology: v5e:2x2
jax: 0.10.0
libtpu: 0.0.40
codegen_flags: <defaults>
</compile_context>

<pallas_src>
import functools

import jax
import jax.numpy as jnp
from jax import lax
from jax.experimental import pallas as pl
from jax.experimental.pallas import tpu as pltpu


def _hardswish(x):
    return x * jnp.clip(x + 3.0, 0.0, 6.0) * (1.0 / 6.0)


# ---------------------------------------------------------------------------
# Main kernel: stride == 1, lane-dense "N,C,(H*W)" layout.
# ---------------------------------------------------------------------------
def _dsc_lane_dense_kernel(x_ref, dw_wm_ref, dw_b_ref, pw_w_ref, pw_b_ref,
                           o_ref, *, K, W, HW):
    # x_ref    : (Nb, C, HW)    bf16  input images (NCHW, spatial flattened)
    # dw_wm_ref: (K*K, C, HW)   f32   depthwise weight (BN1 scale folded) * halo mask
    # dw_b_ref : (C, 1)         f32   folded BN1 bias
    # pw_w_ref : (Cout, C)      bf16  1x1 conv weight (BN2 scale folded), transposed
    # pw_b_ref : (Cout, 1)      f32   folded BN2 bias
    # o_ref    : (Nb, Cout, HW) f32   output, already NCHW-flat (lane-dense stores)
    pad = (K - 1) // 2
    Nb = x_ref.shape[0]

    x = x_ref[...].astype(jnp.float32)          # (Nb, C, HW), f32 accumulation
    dw_wm = dw_wm_ref[...]                      # (K*K, C, HW)

    # Depthwise conv: each tap = static lane rotation (XLU) + one fused
    # mask*weight multiply-add (VPU).  The halo mask in dw_wm zeroes the
    # positions that would have read the (never materialized) zero padding.
    acc = jnp.zeros_like(x)
    for kh in range(K):
        for kw in range(K):
            off = (kh - pad) * W + (kw - pad)
            tap = x if off == 0 else pltpu.roll(x, shift=(-off) % HW, axis=2)
            acc = acc + tap * dw_wm[kh * K + kw]

    # BN1 bias (scale already folded into dw_wm) + Hardswish.
    y = _hardswish(acc + dw_b_ref[...][None])   # (Nb, C, HW) f32
    y = y.astype(jnp.bfloat16)                  # bf16 into the MXU

    # 1x1 conv as (Cout, C) @ (C, HW) per image -> lane-dense (Cout, HW) tiles.
    pw_w = pw_w_ref[...]                        # (Cout, C) bf16
    pw_b = pw_b_ref[...]                        # (Cout, 1) f32
    for n in range(Nb):                         # Nb is small and static
        z = jnp.dot(pw_w, y[n], preferred_element_type=jnp.float32)
        o_ref[n] = _hardswish(z + pw_b).astype(o_ref.dtype)


def _depth_sep_conv_s1(x_nchw, dw_w_f, b1, pw_w_f, b2, *, K):
    N, C, H, W = x_nchw.shape
    HW = H * W
    Cout = pw_w_f.shape[-1]
    pad = (K - 1) // 2

    # Per-tap halo mask (valid input positions) folded together with the
    # (BN1-scale-folded) depthwise weights into one (K*K, C, HW) plane.
    r = jnp.arange(H, dtype=jnp.int32)[:, None]
    c = jnp.arange(W, dtype=jnp.int32)[None, :]
    planes = []
    for kh in range(K):
        for kw in range(K):
            dr, dc = kh - pad, kw - pad
            m = ((r + dr >= 0) & (r + dr < H) & (c + dc >= 0) & (c + dc < W))
            planes.append(m.reshape(HW))
    mask = jnp.stack(planes).astype(jnp.float32)                       # (K*K, HW)
    dw_wm = dw_w_f.reshape(K * K, C)[:, :, None] * mask[:, None, :]    # (K*K, C, HW)

    dw_b = b1.reshape(C, 1)
    pw_b = b2.reshape(Cout, 1)
    pw_wT = pw_w_f.T.astype(jnp.bfloat16)                              # (Cout, C)

    # bf16 activations at the kernel boundary; reshape NCHW -> (N, C, HW) is free.
    x = x_nchw.reshape(N, C, HW).astype(jnp.bfloat16)

    # Images per grid step: amortize per-step overhead but keep >= 2 grid steps
    # (so both v7x TensorCores get work) whenever the batch allows it.
    Nb = 1
    for cand in (8, 4, 2):
        if N % cand == 0 and N // cand >= 2:
            Nb = cand
            break

    flops = 2 * N * HW * C * (K * K + Cout)
    bytes_accessed = (2 * N * C * HW            # bf16 input
                      + 4 * N * Cout * HW       # f32 output
                      + 4 * K * K * C * HW      # masked depthwise weights
                      + 2 * Cout * C + 4 * (C + Cout))

    kernel = functools.partial(_dsc_lane_dense_kernel, K=K, W=W, HW=HW)
    out = pl.pallas_call(
        kernel,
        # NOTE: output kept in f32 for the self-test; switch to bf16 if the
        # consumer accepts it to halve store volume (matters most on v5e).
        out_shape=jax.ShapeDtypeStruct((N, Cout, HW), jnp.float32),
        grid_spec=pltpu.PrefetchScalarGridSpec(
            num_scalar_prefetch=0,
            grid=(N // Nb,),
            in_specs=[
                pl.BlockSpec((Nb, C, HW), lambda i: (i, 0, 0)),
                pl.BlockSpec((K * K, C, HW), lambda i: (0, 0, 0)),
                pl.BlockSpec((C, 1), lambda i: (0, 0)),
                pl.BlockSpec((Cout, C), lambda i: (0, 0)),
                pl.BlockSpec((Cout, 1), lambda i: (0, 0)),
            ],
            out_specs=pl.BlockSpec((Nb, Cout, HW), lambda i: (i, 0, 0)),
        ),
        compiler_params=pltpu.CompilerParams(
            dimension_semantics=("parallel",)),
        cost_estimate=pl.CostEstimate(flops=flops, transcendentals=0,
                                      bytes_accessed=bytes_accessed),
    )(x, dw_wm, dw_b, pw_wT, pw_b)

    # Already NCHW order: just un-flatten the spatial dim (free reshape).
    return out.reshape(N, Cout, H, W)


# ---------------------------------------------------------------------------
# Fallback kernel for stride > 1 (simple NHWC, one padded image per grid step).
# TODO(synk): the lane-dense optimizations are applied on the stride==1 path;
#             this fallback keeps the simpler (previously validated) layout.
# ---------------------------------------------------------------------------
def _dsc_kernel_nhwc(x_ref, dw_w_ref, dw_b_ref, pw_w_ref, pw_b_ref, o_ref,
                     *, K, stride, out_h, out_w):
    xp = x_ref[0].astype(jnp.float32)            # (Hp, Wp, C)
    dw_w = dw_w_ref[...].astype(jnp.float32)     # (K, K, C)  (BN1 scale folded)
    C = xp.shape[-1]
    acc = jnp.zeros((out_h, out_w, C), jnp.float32)
    for kh in range(K):
        for kw in range(K):
            patch = xp[kh:kh + (out_h - 1) * stride + 1:stride,
                       kw:kw + (out_w - 1) * stride + 1:stride, :]
            acc = acc + patch * dw_w[kh, kw, :]
    y = _hardswish(acc + dw_b_ref[0])
    y2d = y.reshape(out_h * out_w, C)
    z = jnp.dot(y2d, pw_w_ref[...].astype(jnp.float32),
                preferred_element_type=jnp.float32)
    z = _hardswish(z + pw_b_ref[0])
    o_ref[0] = z.reshape(out_h, out_w, -1).astype(o_ref.dtype)


def _depth_sep_conv_generic(x_nchw, dw_w_f, b1, pw_w_f, b2, *, K, stride):
    pad = (K - 1) // 2
    N, C, H, W = x_nchw.shape
    Cout = pw_w_f.shape[-1]
    dw_b = b1.reshape(1, C)
    pw_b = b2.reshape(1, Cout)

    x = jnp.transpose(x_nchw, (0, 2, 3, 1)).astype(jnp.float32)
    xp = jnp.pad(x, ((0, 0), (pad, pad), (pad, pad), (0, 0)))
    Hp, Wp = H + 2 * pad, W + 2 * pad
    out_h = (H + 2 * pad - K) // stride + 1
    out_w = (W + 2 * pad - K) // stride + 1

    kernel = functools.partial(_dsc_kernel_nhwc, K=K, stride=stride,
                               out_h=out_h, out_w=out_w)
    out_nhwc = pl.pallas_call(
        kernel,
        out_shape=jax.ShapeDtypeStruct((N, out_h, out_w, Cout), jnp.float32),
        grid_spec=pltpu.PrefetchScalarGridSpec(
            num_scalar_prefetch=0,
            grid=(N,),
            in_specs=[
                pl.BlockSpec((1, Hp, Wp, C), lambda n: (n, 0, 0, 0)),
                pl.BlockSpec((K, K, C), lambda n: (0, 0, 0)),
                pl.BlockSpec((1, C), lambda n: (0, 0)),
                pl.BlockSpec((C, Cout), lambda n: (0, 0)),
                pl.BlockSpec((1, Cout), lambda n: (0, 0)),
            ],
            out_specs=pl.BlockSpec((1, out_h, out_w, Cout),
                                   lambda n: (n, 0, 0, 0)),
        ),
        compiler_params=pltpu.CompilerParams(
            dimension_semantics=("parallel",)),
    )(xp, dw_w_f, dw_b, pw_w_f, pw_b)
    return jnp.transpose(out_nhwc, (0, 3, 1, 2))


# ---------------------------------------------------------------------------
# Public wrapper: fold eval-mode BN, dispatch on stride.
# ---------------------------------------------------------------------------
def depth_sep_conv(x_nchw, params, *, dw_size, stride, use_se=False):
    """Forward pass of DepthSepConv (eval-mode BatchNorm). x_nchw: (N, C, H, W)."""
    if use_se:
        # TODO(synk): SeBlock (use_se=True) is not defined in the reference code.
        raise NotImplementedError("SeBlock (use_se=True) is not implemented")
    K = dw_size
    eps = 1e-5
    C = params["dw_w"].shape[-1]
    Cout = params["pw_w"].shape[-1]

    # Fold BN (eval semantics): scales go into the conv weights, biases remain.
    s1 = params["bn1_gamma"] / jnp.sqrt(params["bn1_var"] + eps)
    b1 = (params["bn1_beta"] - params["bn1_mean"] * s1).astype(jnp.float32)
    s2 = params["bn2_gamma"] / jnp.sqrt(params["bn2_var"] + eps)
    b2 = (params["bn2_beta"] - params["bn2_mean"] * s2).astype(jnp.float32)
    dw_w_f = (params["dw_w"] * s1).astype(jnp.float32)             # (K, K, C)
    pw_w_f = (params["pw_w"] * s2[None, :]).astype(jnp.float32)    # (C, Cout)

    if stride == 1:
        return _depth_sep_conv_s1(x_nchw, dw_w_f, b1, pw_w_f, b2, K=K)
    return _depth_sep_conv_generic(x_nchw, dw_w_f, b1, pw_w_f, b2,
                                   K=K, stride=stride)


# ---------------------------------------------------------------------------
# Pure-JAX reference (lax conv) for correctness checking.
# ---------------------------------------------------------------------------
def _reference(x_nchw, params, *, dw_size, stride, match_kernel_precision=False):
    K = dw_size
    pad = (K - 1) // 2
    eps = 1e-5
    C = params["dw_w"].shape[-1]

    s1 = params["bn1_gamma"] / jnp.sqrt(params["bn1_var"] + eps)
    b1 = params["bn1_beta"] - params["bn1_mean"] * s1
    s2 = params["bn2_gamma"] / jnp.sqrt(params["bn2_var"] + eps)
    b2 = params["bn2_beta"] - params["bn2_mean"] * s2
    w_dw = params["dw_w"] * s1                    # BN1 scale folded, like the kernel
    w_pw = params["pw_w"] * s2[None, :]           # BN2 scale folded
    if match_kernel_precision:                    # mimic the kernel's bf16 casts
        w_pw = w_pw.astype(jnp.bfloat16).astype(jnp.float32)

    x = jnp.transpose(x_nchw, (0, 2, 3, 1)).astype(jnp.float32)
    dw = lax.conv_general_dilated(
        x, w_dw.reshape(K, K, 1, C),
        window_strides=(stride, stride),
        padding=[(pad, pad), (pad, pad)],
        dimension_numbers=("NHWC", "HWIO", "NHWC"),
        feature_group_count=C,
        precision=lax.Precision.HIGHEST)
    y = _hardswish(dw + b1)
    if match_kernel_precision:
        y = y.astype(jnp.bfloat16).astype(jnp.float32)
    z = jnp.einsum("nhwc,co->nhwo", y, w_pw, precision=lax.Precision.HIGHEST)
    z = _hardswish(z + b2)
    return jnp.transpose(z, (0, 3, 1, 2))


def make_params(key, inp, oup, dw_size):
    ks = jax.random.split(key, 6)
    return {
        "dw_w": 0.2 * jax.random.normal(ks[0], (dw_size, dw_size, inp), jnp.float32),
        "pw_w": 0.2 * jax.random.normal(ks[1], (inp, oup), jnp.float32),
        "bn1_gamma": 1.0 + 0.1 * jax.random.normal(ks[2], (inp,), jnp.float32),
        "bn1_beta": 0.05 * jax.random.normal(ks[3], (inp,), jnp.float32),
        "bn1_mean": 0.1 * jnp.arange(inp, dtype=jnp.float32) / inp,
        "bn1_var": 1.0 + 0.1 * jnp.arange(inp, dtype=jnp.float32) / inp,
        "bn2_gamma": 1.0 + 0.1 * jax.random.normal(ks[4], (oup,), jnp.float32),
        "bn2_beta": 0.05 * jax.random.normal(ks[5], (oup,), jnp.float32),
        "bn2_mean": 0.05 * jnp.arange(oup, dtype=jnp.float32) / oup,
        "bn2_var": 1.0 + 0.05 * jnp.arange(oup, dtype=jnp.float32) / oup,
    }


if __name__ == "__main__":
    # DepthSepConv(inp=8, oup=16, dw_size=3, stride=1, use_se=False)
    inp, oup, dw_size, stride = 8, 16, 3, 1
    N, H, W = 2, 16, 16

    key = jax.random.PRNGKey(0)
    kx, kp = jax.random.split(key)
    x = jax.random.normal(kx, (N, inp, H, W), jnp.float32)
    # Quantize the activations once so the (bf16-input) kernel and the f32
    # reference see identical input values.
    x = x.astype(jnp.bfloat16).astype(jnp.float32)
    params = make_params(kp, inp, oup, dw_size)

    out = depth_sep_conv(x, params, dw_size=dw_size, stride=stride)
    out = jax.block_until_ready(out)
    assert out.shape == (N, oup, H // stride, W // stride)

    # 1) Reference with the same bf16 casts as the kernel -> tight tolerance.
    ref_m = _reference(x, params, dw_size=dw_size, stride=stride,
                       match_kernel_precision=True)
    err_m = float(jnp.max(jnp.abs(out - ref_m)))
    assert err_m < 1e-2, f"mismatch vs precision-matched reference: {err_m}"

    # 2) Full-f32 reference -> bf16-I/O-level tolerance.
    ref = _reference(x, params, dw_size=dw_size, stride=stride)
    err = float(jnp.max(jnp.abs(out - ref)))
    assert err < 5e-2, f"mismatch vs f32 reference: {err}"

    print("KERNEL_OK")
</pallas_src>

<mosaic_0001>
module attributes {stable_mosaic.version = 11 : i64} {
  func.func @_dsc_lane_dense_kernel(%arg0: i32, %arg1: memref<1x8x256xbf16, #tpu.memory_space<vmem>>, %arg2: memref<9x8x256xf32, #tpu.memory_space<vmem>>, %arg3: memref<8x1xf32, #tpu.memory_space<vmem>>, %arg4: memref<16x8xbf16, #tpu.memory_space<vmem>>, %arg5: memref<16x1xf32, #tpu.memory_space<vmem>>, %arg6: memref<1x16x256xf32, #tpu.memory_space<vmem>>) attributes {dimension_semantics = [#tpu.dimension_semantics<parallel>], iteration_bounds = array<i64: 2>, scalar_prefetch = 0 : i64, scratch_operands = 0 : i64, tpu.core_type = #tpu.core_type<tc>, window_params = [{transform_indices = @transform_0, window_bounds = array<i64: 1, 8, 256>}, {pipeline_mode = #tpu.pipeline_mode<synchronous>, transform_indices = @transform_1, window_bounds = array<i64: 9, 8, 256>}, {pipeline_mode = #tpu.pipeline_mode<synchronous>, transform_indices = @transform_2, window_bounds = array<i64: 8, 1>}, {pipeline_mode = #tpu.pipeline_mode<synchronous>, transform_indices = @transform_3, window_bounds = array<i64: 16, 8>}, {pipeline_mode = #tpu.pipeline_mode<synchronous>, transform_indices = @transform_4, window_bounds = array<i64: 16, 1>}, {transform_indices = @transform_5, window_bounds = array<i64: 1, 16, 256>}]} {
    %c0 = arith.constant 0 : index
    %c0_0 = arith.constant 0 : index
    %c0_1 = arith.constant 0 : index
    %0 = vector.load %arg1[%c0, %c0_0, %c0_1] : memref<1x8x256xbf16, #tpu.memory_space<vmem>>, vector<1x8x256xbf16>
    %1 = arith.extf %0 : vector<1x8x256xbf16> to vector<1x8x256xf32>
    %c0_2 = arith.constant 0 : index
    %c0_3 = arith.constant 0 : index
    %c0_4 = arith.constant 0 : index
    %2 = vector.load %arg2[%c0_2, %c0_3, %c0_4] : memref<9x8x256xf32, #tpu.memory_space<vmem>>, vector<9x8x256xf32>
    %cst = arith.constant 0.000000e+00 : f32
    %3 = vector.broadcast %cst : f32 to vector<1x8x256xf32>
    %c17_i32 = arith.constant 17 : i32
    %4 = tpu.dynamic_rotate %1 by %c17_i32 dim 2 : vector<1x8x256xf32>, i32 -> vector<1x8x256xf32>
    %5 = vector.extract_strided_slice %2 {offsets = [0, 0, 0], sizes = [1, 8, 256], strides = [1, 1, 1]} : vector<9x8x256xf32> to vector<1x8x256xf32>
    %6 = vector.shape_cast %5 : vector<1x8x256xf32> to vector<8x256xf32>
    %7 = vector.shape_cast %6 : vector<8x256xf32> to vector<1x8x256xf32>
    %8 = arith.mulf %4, %7 : vector<1x8x256xf32>
    %9 = arith.addf %3, %8 : vector<1x8x256xf32>
    %c16_i32 = arith.constant 16 : i32
    %10 = tpu.dynamic_rotate %1 by %c16_i32 dim 2 : vector<1x8x256xf32>, i32 -> vector<1x8x256xf32>
    %11 = vector.extract_strided_slice %2 {offsets = [1, 0, 0], sizes = [1, 8, 256], strides = [1, 1, 1]} : vector<9x8x256xf32> to vector<1x8x256xf32>
    %12 = vector.shape_cast %11 : vector<1x8x256xf32> to vector<8x256xf32>
    %13 = vector.shape_cast %12 : vector<8x256xf32> to vector<1x8x256xf32>
    %14 = arith.mulf %10, %13 : vector<1x8x256xf32>
    %15 = arith.addf %9, %14 : vector<1x8x256xf32>
    %c15_i32 = arith.constant 15 : i32
    %16 = tpu.dynamic_rotate %1 by %c15_i32 dim 2 : vector<1x8x256xf32>, i32 -> vector<1x8x256xf32>
    %17 = vector.extract_strided_slice %2 {offsets = [2, 0, 0], sizes = [1, 8, 256], strides = [1, 1, 1]} : vector<9x8x256xf32> to vector<1x8x256xf32>
    %18 = vector.shape_cast %17 : vector<1x8x256xf32> to vector<8x256xf32>
    %19 = vector.shape_cast %18 : vector<8x256xf32> to vector<1x8x256xf32>
    %20 = arith.mulf %16, %19 : vector<1x8x256xf32>
    %21 = arith.addf %15, %20 : vector<1x8x256xf32>
    %c1_i32 = arith.constant 1 : i32
    %22 = tpu.dynamic_rotate %1 by %c1_i32 dim 2 : vector<1x8x256xf32>, i32 -> vector<1x8x256xf32>
    %23 = vector.extract_strided_slice %2 {offsets = [3, 0, 0], sizes = [1, 8, 256], strides = [1, 1, 1]} : vector<9x8x256xf32> to vector<1x8x256xf32>
    %24 = vector.shape_cast %23 : vector<1x8x256xf32> to vector<8x256xf32>
    %25 = vector.shape_cast %24 : vector<8x256xf32> to vector<1x8x256xf32>
    %26 = arith.mulf %22, %25 : vector<1x8x256xf32>
    %27 = arith.addf %21, %26 : vector<1x8x256xf32>
    %28 = vector.extract_strided_slice %2 {offsets = [4, 0, 0], sizes = [1, 8, 256], strides = [1, 1, 1]} : vector<9x8x256xf32> to vector<1x8x256xf32>
    %29 = vector.shape_cast %28 : vector<1x8x256xf32> to vector<8x256xf32>
    %30 = vector.shape_cast %29 : vector<8x256xf32> to vector<1x8x256xf32>
    %31 = arith.mulf %1, %30 : vector<1x8x256xf32>
    %32 = arith.addf %27, %31 : vector<1x8x256xf32>
    %c255_i32 = arith.constant 255 : i32
    %33 = tpu.dynamic_rotate %1 by %c255_i32 dim 2 : vector<1x8x256xf32>, i32 -> vector<1x8x256xf32>
    %34 = vector.extract_strided_slice %2 {offsets = [5, 0, 0], sizes = [1, 8, 256], strides = [1, 1, 1]} : vector<9x8x256xf32> to vector<1x8x256xf32>
    %35 = vector.shape_cast %34 : vector<1x8x256xf32> to vector<8x256xf32>
    %36 = vector.shape_cast %35 : vector<8x256xf32> to vector<1x8x256xf32>
    %37 = arith.mulf %33, %36 : vector<1x8x256xf32>
    %38 = arith.addf %32, %37 : vector<1x8x256xf32>
    %c241_i32 = arith.constant 241 : i32
    %39 = tpu.dynamic_rotate %1 by %c241_i32 dim 2 : vector<1x8x256xf32>, i32 -> vector<1x8x256xf32>
    %40 = vector.extract_strided_slice %2 {offsets = [6, 0, 0], sizes = [1, 8, 256], strides = [1, 1, 1]} : vector<9x8x256xf32> to vector<1x8x256xf32>
    %41 = vector.shape_cast %40 : vector<1x8x256xf32> to vector<8x256xf32>
    %42 = vector.shape_cast %41 : vector<8x256xf32> to vector<1x8x256xf32>
    %43 = arith.mulf %39, %42 : vector<1x8x256xf32>
    %44 = arith.addf %38, %43 : vector<1x8x256xf32>
    %c240_i32 = arith.constant 240 : i32
    %45 = tpu.dynamic_rotate %1 by %c240_i32 dim 2 : vector<1x8x256xf32>, i32 -> vector<1x8x256xf32>
    %46 = vector.extract_strided_slice %2 {offsets = [7, 0, 0], sizes = [1, 8, 256], strides = [1, 1, 1]} : vector<9x8x256xf32> to vector<1x8x256xf32>
    %47 = vector.shape_cast %46 : vector<1x8x256xf32> to vector<8x256xf32>
    %48 = vector.shape_cast %47 : vector<8x256xf32> to vector<1x8x256xf32>
    %49 = arith.mulf %45, %48 : vector<1x8x256xf32>
    %50 = arith.addf %44, %49 : vector<1x8x256xf32>
    %c239_i32 = arith.constant 239 : i32
    %51 = tpu.dynamic_rotate %1 by %c239_i32 dim 2 : vector<1x8x256xf32>, i32 -> vector<1x8x256xf32>
    %52 = vector.extract_strided_slice %2 {offsets = [8, 0, 0], sizes = [1, 8, 256], strides = [1, 1, 1]} : vector<9x8x256xf32> to vector<1x8x256xf32>
    %53 = vector.shape_cast %52 : vector<1x8x256xf32> to vector<8x256xf32>
    %54 = vector.shape_cast %53 : vector<8x256xf32> to vector<1x8x256xf32>
    %55 = arith.mulf %51, %54 : vector<1x8x256xf32>
    %56 = arith.addf %50, %55 : vector<1x8x256xf32>
    %c0_5 = arith.constant 0 : index
    %c0_6 = arith.constant 0 : index
    %57 = vector.load %arg3[%c0_5, %c0_6] : memref<8x1xf32, #tpu.memory_space<vmem>>, vector<8x1xf32>
    %58 = vector.shape_cast %57 : vector<8x1xf32> to vector<1x8x1xf32>
    %59 = vector.broadcast %58 : vector<1x8x1xf32> to vector<1x8x256xf32>
    %60 = arith.addf %56, %59 : vector<1x8x256xf32>
    %cst_7 = arith.constant 3.000000e+00 : f32
    %61 = vector.broadcast %cst_7 : f32 to vector<1x8x256xf32>
    %62 = arith.addf %60, %61 : vector<1x8x256xf32>
    %cst_8 = arith.constant 0.000000e+00 : f32
    %cst_9 = arith.constant 6.000000e+00 : f32
    %63 = vector.broadcast %cst_8 : f32 to vector<1x8x256xf32>
    %64 = arith.maximumf %63, %62 : vector<1x8x256xf32>
    %65 = vector.broadcast %cst_9 : f32 to vector<1x8x256xf32>
    %66 = arith.minimumf %65, %64 : vector<1x8x256xf32>
    %67 = arith.mulf %60, %66 : vector<1x8x256xf32>
    %cst_10 = arith.constant 0.166666672 : f32
    %68 = vector.broadcast %cst_10 : f32 to vector<1x8x256xf32>
    %69 = arith.mulf %67, %68 : vector<1x8x256xf32>
    %70 = arith.truncf %69 : vector<1x8x256xf32> to vector<1x8x256xbf16>
    %c0_11 = arith.constant 0 : index
    %c0_12 = arith.constant 0 : index
    %71 = vector.load %arg4[%c0_11, %c0_12] : memref<16x8xbf16, #tpu.memory_space<vmem>>, vector<16x8xbf16>
    %c0_13 = arith.constant 0 : index
    %c0_14 = arith.constant 0 : index
    %72 = vector.load %arg5[%c0_13, %c0_14] : memref<16x1xf32, #tpu.memory_space<vmem>>, vector<16x1xf32>
    %73 = vector.shape_cast %70 : vector<1x8x256xbf16> to vector<8x256xbf16>
    %cst_15 = arith.constant dense<0.000000e+00> : vector<16x256xf32>
    %74 = tpu.matmul %71, %73, %cst_15 {dimension_numbers = #tpu.dot_dimension_numbers<[1], [0], [0], [1], [0, 0, 1, 1], [], []>} : vector<16x8xbf16>, vector<8x256xbf16>, vector<16x256xf32> -> vector<16x256xf32>
    %75 = vector.broadcast %72 : vector<16x1xf32> to vector<16x256xf32>
    %76 = arith.addf %74, %75 : vector<16x256xf32>
    %cst_16 = arith.constant 3.000000e+00 : f32
    %77 = vector.broadcast %cst_16 : f32 to vector<16x256xf32>
    %78 = arith.addf %76, %77 : vector<16x256xf32>
    %cst_17 = arith.constant 0.000000e+00 : f32
    %cst_18 = arith.constant 6.000000e+00 : f32
    %79 = vector.broadcast %cst_17 : f32 to vector<16x256xf32>
    %80 = arith.maximumf %79, %78 : vector<16x256xf32>
    %81 = vector.broadcast %cst_18 : f32 to vector<16x256xf32>
    %82 = arith.minimumf %81, %80 : vector<16x256xf32>
    %83 = arith.mulf %76, %82 : vector<16x256xf32>
    %cst_19 = arith.constant 0.166666672 : f32
    %84 = vector.broadcast %cst_19 : f32 to vector<16x256xf32>
    %85 = arith.mulf %83, %84 : vector<16x256xf32>
    %c0_20 = arith.constant 0 : index
    %c0_21 = arith.constant 0 : index
    %c0_22 = arith.constant 0 : index
    %86 = vector.load %arg6[%c0_20, %c0_21, %c0_22] : memref<1x16x256xf32, #tpu.memory_space<vmem>>, vector<1x16x256xf32>
    %87 = vector.shape_cast %86 : vector<1x16x256xf32> to vector<16x256xf32>
    %88 = vector.shape_cast %85 : vector<16x256xf32> to vector<1x16x256xf32>
    tpu.vector_store %arg6[%c0_20, %c0_21, %c0_22], %88 {strides = array<i32>} : memref<1x16x256xf32, #tpu.memory_space<vmem>>, vector<1x16x256xf32>,
    return
  }
  func.func @transform_0(%arg0: i32) -> (i32, i32, i32) {
    %c0_i32 = arith.constant 0 : i32
    %c0_i32_0 = arith.constant 0 : i32
    %c0_i32_1 = arith.constant 0 : i32
    return %arg0, %c0_i32, %c0_i32_0 : i32, i32, i32
  }
  func.func @transform_1(%arg0: i32) -> (i32, i32, i32) {
    %c0_i32 = arith.constant 0 : i32
    %c0_i32_0 = arith.constant 0 : i32
    %c0_i32_1 = arith.constant 0 : i32
    %c0_i32_2 = arith.constant 0 : i32
    return %c0_i32, %c0_i32_0, %c0_i32_1 : i32, i32, i32
  }
  func.func @transform_2(%arg0: i32) -> (i32, i32) {
    %c0_i32 = arith.constant 0 : i32
    %c0_i32_0 = arith.constant 0 : i32
    %c0_i32_1 = arith.constant 0 : i32
    return %c0_i32, %c0_i32_0 : i32, i32
  }
  func.func @transform_3(%arg0: i32) -> (i32, i32) {
    %c0_i32 = arith.constant 0 : i32
    %c0_i32_0 = arith.constant 0 : i32
    %c0_i32_1 = arith.constant 0 : i32
    return %c0_i32, %c0_i32_0 : i32, i32
  }
  func.func @transform_4(%arg0: i32) -> (i32, i32) {
    %c0_i32 = arith.constant 0 : i32
    %c0_i32_0 = arith.constant 0 : i32
    %c0_i32_1 = arith.constant 0 : i32
    return %c0_i32, %c0_i32_0 : i32, i32
  }
  func.func @transform_5(%arg0: i32) -> (i32, i32, i32) {
    %c0_i32 = arith.constant 0 : i32
    %c0_i32_0 = arith.constant 0 : i32
    %c0_i32_1 = arith.constant 0 : i32
    return %arg0, %c0_i32, %c0_i32_0 : i32, i32, i32
  }
}

</mosaic_0001>

<llo_original>
// kernel: tpu_custom_call.1
$region0: #{tpu_custom_call.1}
  #allocation0 [shape = 'u32[]', space=smem, size = 0x4, offset = 0x4, fixed_abs, tag = 'smem constant byte address 0x4 - core index']
  #allocation1 [shape = 'u32[72,128]{1,0:T(1,128)}', space=vmem, size = 0x9000, scoped, tag = 'internal scratch']
  %s0 = inlined_call_operand.vmem [shape: bf16[2,8,256], index: 0, kind: input, shape index: {}]
  %s1 = inlined_call_operand.hbm [shape: f32[9,8,256], index: 1, kind: input, shape index: {}]
  %s2 = inlined_call_operand.vmem [shape: f32[8,1], index: 2, kind: input, shape index: {}]
  %s3 = inlined_call_operand.vmem [shape: bf16[16,8], index: 3, kind: input, shape index: {}]
  %s4 = inlined_call_operand.vmem [shape: f32[16,1], index: 4, kind: input, shape index: {}]
  %s5 = inlined_call_operand.hbm [shape: f32[2,16,256], index: 5, kind: output, shape index: {}]
  %s6 = sld [smem:[#allocation0]]
  $region57: #{tpu_custom_call.1} parent=0
    _
  %s8 = ssub.s32 1, %s6
  %s9 = scalar_select 0, %s8, %s6
  $region1: #{tpu_custom_call.1} parent=0
    #allocation2 [shape = 'u8[73728]{0}', space=vmem, size = 0x12000, scoped, tag = 'input window, operand 1, single buffered']
    #allocation3 [shape = 's32[2]{0}', space=sflag, size = 0x8, scoped, tag = 'scoped memory for tpu_custom_call.1']
    #allocation4 [shape = 's32[2]{0}', space=sflag, size = 0x8, scoped, tag = 'scoped memory for tpu_custom_call.1']
    #allocation5 [shape = 'u8[32768]{0}', space=vmem, size = 0x8000, scoped, tag = 'output window, operand 0']
    %10 = vsyncpa [#allocation3], 0
    %11 = vsyncpa [#allocation4], 0
    %s12 = scalar_lea.sflag [#allocation4], 1
    %13 = vsyncpa %s12, 0
    loop: start=0, step=1, limit=4
    $region2: #{tpu_custom_call.1} parent=1 // loop_pre_header
      _
    $region3: #{tpu_custom_call.1} parent=1 // loop_header
      %s15 = sphi 0, %s19
      %p16 = scmp.ge.s32.totalorder %s15, 4
      %s25 = sphi 0, %s27
      %s28 = sphi 0, %s25
      %s29 = sphi 0, %s28
      %s45 = sphi 0, %s29
      %s49 = sphi 0, %s49
      %s51 = sphi 0, %s49
      %s52 = sphi 0, %s51
      %s66 = sphi 0, %s52
      %s70 = sphi 0, %s70
      %s72 = sphi 0, %s70
      %s73 = sphi 0, %s72
      %s87 = sphi 0, %s73
      %s91 = sphi 0, %s91
      %s93 = sphi 0, %s91
      %s94 = sphi 0, %s93
      %s108 = sphi 0, %s94
      %s112 = sphi 0, %s112
      %s114 = sphi 0, %s112
      %s115 = sphi 0, %s114
      %s129 = sphi 0, %s115
      %s135 = sphi 0, %s137
      %s138 = sphi 0, %s135
      %s139 = sphi 0, %s138
      %s155 = sphi 0, %s139
    $region4: #{tpu_custom_call.1} parent=1 // loop_header_branch
      %18 = sbr.rel (%p16) target = $region8
    $region5: #{tpu_custom_call.1} parent=1 // loop_body
      %s20 = ssub.s32 %s15, 1
      %s21 = ssub.s32 %s15, 2
      %s22 = sadd.s32 %s15, 1
      %s23 = ssub.s32 %s15, %s22
      %p24 = scmp.eq.s32.totalorder %s23, 0
      %s26 = sadd.s32 %s25, 1
      %s27 = scalar_select %p24, %s25, %s26
      %p30 = pneg %p24
      %p31 = scmp.eq.s32.totalorder %s15, 1
      %p32 = por %p30, %p31
      %p33 = scmp.ne.s32.totalorder %s25, %s28
      %p34 = scmp.eq.s32.totalorder %s15, 0
      %p35 = por %p33, %p34
      %p36 = scmp.ne.s32.totalorder %s25, %s28
      %p37 = scmp.eq.s32.totalorder %s20, 1
      %p38 = por %p36, %p37
      %p39 = scmp.ne.s32.totalorder %s28, %s29
      %p40 = scmp.eq.s32.totalorder %s20, 0
      %p41 = por %p39, %p40
      %p42 = scmp.ne.s32.totalorder %s28, %s29
      %p43 = scmp.eq.s32.totalorder %s21, 1
      %p44 = por %p42, %p43
      %p46 = scmp.ne.s32.totalorder %s29, %s45
      %p47 = scmp.eq.s32.totalorder %s21, 0
      %p48 = por %p46, %p47
      %s50 = sadd.s32 %s49, 1
      %p53 = scmp.eq.s32.totalorder %s15, 1
      %p54 = scmp.ne.s32.totalorder %s49, %s51
      %p55 = scmp.eq.s32.totalorder %s15, 0
      %p56 = por %p54, %p55
      %p57 = scmp.ne.s32.totalorder %s49, %s51
      %p58 = scmp.eq.s32.totalorder %s20, 1
      %p59 = por %p57, %p58
      %p60 = scmp.ne.s32.totalorder %s51, %s52
      %p61 = scmp.eq.s32.totalorder %s20, 0
      %p62 = por %p60, %p61
      %p63 = scmp.ne.s32.totalorder %s51, %s52
      %p64 = scmp.eq.s32.totalorder %s21, 1
      %p65 = por %p63, %p64
      %p67 = scmp.ne.s32.totalorder %s52, %s66
      %p68 = scmp.eq.s32.totalorder %s21, 0
      %p69 = por %p67, %p68
      %s71 = sadd.s32 %s70, 1
      %p74 = scmp.eq.s32.totalorder %s15, 1
      %p75 = scmp.ne.s32.totalorder %s70, %s72
      %p76 = scmp.eq.s32.totalorder %s15, 0
      %p77 = por %p75, %p76
      %p78 = scmp.ne.s32.totalorder %s70, %s72
      %p79 = scmp.eq.s32.totalorder %s20, 1
      %p80 = por %p78, %p79
      %p81 = scmp.ne.s32.totalorder %s72, %s73
      %p82 = scmp.eq.s32.totalorder %s20, 0
      %p83 = por %p81, %p82
      %p84 = scmp.ne.s32.totalorder %s72, %s73
      %p85 = scmp.eq.s32.totalorder %s21, 1
      %p86 = por %p84, %p85
      %p88 = scmp.ne.s32.totalorder %s73, %s87
      %p89 = scmp.eq.s32.totalorder %s21, 0
      %p90 = por %p88, %p89
      %s92 = sadd.s32 %s91, 1
      %p95 = scmp.eq.s32.totalorder %s15, 1
      %p96 = scmp.ne.s32.totalorder %s91, %s93
      %p97 = scmp.eq.s32.totalorder %s15, 0
      %p98 = por %p96, %p97
      %p99 = scmp.ne.s32.totalorder %s91, %s93
      %p100 = scmp.eq.s32.totalorder %s20, 1
      %p101 = por %p99, %p100
      %p102 = scmp.ne.s32.totalorder %s93, %s94
      %p103 = scmp.eq.s32.totalorder %s20, 0
      %p104 = por %p102, %p103
      %p105 = scmp.ne.s32.totalorder %s93, %s94
      %p106 = scmp.eq.s32.totalorder %s21, 1
      %p107 = por %p105, %p106
      %p109 = scmp.ne.s32.totalorder %s94, %s108
      %p110 = scmp.eq.s32.totalorder %s21, 0
      %p111 = por %p109, %p110
      %s113 = sadd.s32 %s112, 1
      %p116 = scmp.eq.s32.totalorder %s15, 1
      %p117 = scmp.ne.s32.totalorder %s112, %s114
      %p118 = scmp.eq.s32.totalorder %s15, 0
      %p119 = por %p117, %p118
      %p120 = scmp.ne.s32.totalorder %s112, %s114
      %p121 = scmp.eq.s32.totalorder %s20, 1
      %p122 = por %p120, %p121
      %p123 = scmp.ne.s32.totalorder %s114, %s115
      %p124 = scmp.eq.s32.totalorder %s20, 0
      %p125 = por %p123, %p124
      %p126 = scmp.ne.s32.totalorder %s114, %s115
      %p127 = scmp.eq.s32.totalorder %s21, 1
      %p128 = por %p126, %p127
      %p130 = scmp.ne.s32.totalorder %s115, %s129
      %p131 = scmp.eq.s32.totalorder %s21, 0
      %p132 = por %p130, %p131
      %s133 = ssub.s32 %s15, %s22
      %p134 = scmp.eq.s32.totalorder %s133, 0
      %s136 = sadd.s32 %s135, 1
      %s137 = scalar_select %p134, %s135, %s136
      %p140 = pneg %p134
      %p141 = scmp.eq.s32.totalorder %s15, 1
      %p142 = por %p140, %p141
      %p143 = scmp.ne.s32.totalorder %s135, %s138
      %p144 = scmp.eq.s32.totalorder %s15, 0
      %p145 = por %p143, %p144
      %p146 = scmp.ne.s32.totalorder %s135, %s138
      %p147 = scmp.eq.s32.totalorder %s20, 1
      %p148 = por %p146, %p147
      %p149 = scmp.ne.s32.totalorder %s138, %s139
      %p150 = scmp.eq.s32.totalorder %s20, 0
      %p151 = por %p149, %p150
      %p152 = scmp.ne.s32.totalorder %s138, %s139
      %p153 = scmp.eq.s32.totalorder %s21, 1
      %p154 = por %p152, %p153
      %p156 = scmp.ne.s32.totalorder %s139, %s155
      %p157 = scmp.eq.s32.totalorder %s21, 0
      %p158 = por %p156, %p157
      %p159 = scmp.le.s32.totalorder 1, %s15
      %p160 = scmp.lt.s32.totalorder %s15, 3
      %p161 = pnand %p159, %p160
      %p162 = pneg %p161
      // Predicated region
      $region9: #{tpu_custom_call.1} parent=5 // pred_check
        _
      $region10: #{tpu_custom_call.1} parent=5 // pred_check_branch
        %164 = sbr.rel (%p161) target = $region12
      $region11: #{tpu_custom_call.1} parent=5 // pred_region
        %s165 = ssub.s32 %s15, 1
        // Predicated region
        $region13: #{tpu_custom_call.1} parent=11 // pred_check
          %p166 = pneg %p62
        $region14: #{tpu_custom_call.1} parent=11 // pred_check_branch
          %168 = sbr.rel (%p166) target = $region16
        $region15: #{tpu_custom_call.1} parent=11 // pred_region
          %170 = vsyncadd [#allocation3], 0
          %s171 = sshll.u32 %s1, 4
          %s172 = int_to_ptr.hbm [resolvable:$true] %s171
          %s173 = sshll.u32 [#allocation2], 4
          %s174 = int_to_ptr.vmem [resolvable:$true] %s173
          %179 = dma.hbm_to_vmem [thread:$0]  %s172, 2304, %s174, [#allocation3], 256, 256, 16
        $region16: #{tpu_custom_call.1} parent=11 // pred_fallthru
          _
        // Predicated region
        $region17: #{tpu_custom_call.1} parent=11 // pred_check
          %p180 = pneg %p83
        $region18: #{tpu_custom_call.1} parent=11 // pred_check_branch
          %182 = sbr.rel (%p180) target = $region20
        $region19: #{tpu_custom_call.1} parent=11 // pred_region
          _
        $region20: #{tpu_custom_call.1} parent=11 // pred_fallthru
          _
        // Predicated region
        $region21: #{tpu_custom_call.1} parent=11 // pred_check
          %p183 = pneg %p104
        $region22: #{tpu_custom_call.1} parent=11 // pred_check_branch
          %185 = sbr.rel (%p183) target = $region24
        $region23: #{tpu_custom_call.1} parent=11 // pred_region
          _
        $region24: #{tpu_custom_call.1} parent=11 // pred_fallthru
          _
        // Predicated region
        $region25: #{tpu_custom_call.1} parent=11 // pred_check
          %p186 = pneg %p125
        $region26: #{tpu_custom_call.1} parent=11 // pred_check_branch
          %188 = sbr.rel (%p186) target = $region28
        $region27: #{tpu_custom_call.1} parent=11 // pred_region
          _
        $region28: #{tpu_custom_call.1} parent=11 // pred_fallthru
          _
      $region12: #{tpu_custom_call.1} parent=5 // pred_fallthru
        _
      %p189 = scmp.lt.s32.totalorder %s15, 2
      // Predicated region
      $region29: #{tpu_custom_call.1} parent=5 // pred_check
        %p190 = pneg %p189
      $region30: #{tpu_custom_call.1} parent=5 // pred_check_branch
        %192 = sbr.rel (%p190) target = $region32
      $region31: #{tpu_custom_call.1} parent=5 // pred_region
        // Predicated region
        $region33: #{tpu_custom_call.1} parent=31 // pred_check
          %p193 = pneg %p35
        $region34: #{tpu_custom_call.1} parent=31 // pred_check_branch
          %195 = sbr.rel (%p193) target = $region36
        $region35: #{tpu_custom_call.1} parent=31 // pred_region
          %p196 = scmp.lt.s32.totalorder %s15, 1
          %s197 = scalar_select %p196, %s15, 1
          %s198 = smul.addr %s197, 2
          %s199 = smul.addr %s198, 4
          %s200 = scalar_lea.vmem %s0, %s199
        $region36: #{tpu_custom_call.1} parent=31 // pred_fallthru
          _
      $region32: #{tpu_custom_call.1} parent=5 // pred_fallthru
        _
      %p201 = scmp.le.s32.totalorder 1, %s15
      %p202 = scmp.lt.s32.totalorder %s15, 3
      %p203 = pnand %p201, %p202
      %p204 = pneg %p203
      // Predicated region
      $region37: #{tpu_custom_call.1} parent=5 // pred_check
        _
      $region38: #{tpu_custom_call.1} parent=5 // pred_check_branch
        %206 = sbr.rel (%p203) target = $region40
      $region39: #{tpu_custom_call.1} parent=5 // pred_region
        %s207 = ssub.s32 %s15, 1
        // Predicated region
        $region41: #{tpu_custom_call.1} parent=39 // pred_check
          %p208 = pneg %p62
        $region42: #{tpu_custom_call.1} parent=39 // pred_check_branch
          %210 = sbr.rel (%p208) target = $region44
        $region43: #{tpu_custom_call.1} parent=39 // pred_region
          %212 = dma.done [#allocation3], 2304
        $region44: #{tpu_custom_call.1} parent=39 // pred_fallthru
          _
        %p213 = scmp.lt.s32.totalorder %s20, 1
        %s214 = scalar_select %p213, %s20, 1
        %s215 = smul.addr %s214, 2
        %s216 = smul.addr %s215, 4
        %s217 = scalar_lea.vmem %s0, %s216
        %p218 = pneg %p41
        %p219 = pneg %p38
        %p220 = pneg %p62
        %p221 = pneg %p59
        %p222 = pneg %p83
        %p223 = pneg %p80
        %p224 = pneg %p104
        %p225 = pneg %p101
        %p226 = pneg %p125
        %p227 = pneg %p122
        %p228 = pneg %p151
        %p229 = pneg %p148
        %s230 = sand.u32 %s138, 1
        %s231 = scalar_lea.sflag [#allocation4], %s230
        %s232 = sand.u32 %s138, 1
        %s233 = smul.addr %s232, 32
        %s234 = scalar_lea.vmem [#allocation5], %s233
        %p235 = scmp.lt.s32.totalorder %s20, 1
        %s236 = scalar_select %p235, %s20, 1
        %s237 = smul.addr %s236, 2
        %s238 = smul.addr %s237, 4
        %s239 = scalar_lea.vmem %s0, %s238
        %v241 = vld [vmem:[%s239] sm:$0xff]
        %v242 = vunpack.c.l.bf16 %v241
        %v243 = vunpack.c.h.bf16 %v241
        %v244 = vld [vmem:[#allocation2] sm:$0xff]
        %v245 = vld [vmem:[#allocation2 + $0x8] sm:$0xff]
        %v246 = vld [vmem:[#allocation2 + $0x10] sm:$0xff]
        %v247 = vld [vmem:[#allocation2 + $0x18] sm:$0xff]
        %v248 = vld [vmem:[#allocation2 + $0x20] sm:$0xff]
        %v249 = vld [vmem:[#allocation2 + $0x28] sm:$0xff]
        %v250 = vld [vmem:[#allocation2 + $0x30] sm:$0xff]
        %v251 = vld [vmem:[#allocation2 + $0x38] sm:$0xff]
        %v252 = vld [vmem:[#allocation2 + $0x40] sm:$0xff]
        %v253 = vld [vmem:[#allocation2 + $0x48] sm:$0xff]
        %v254 = vld [vmem:[#allocation2 + $0x50] sm:$0xff]
        %v255 = vld [vmem:[#allocation2 + $0x58] sm:$0xff]
        %v256 = vld [vmem:[#allocation2 + $0x60] sm:$0xff]
        %v257 = vld [vmem:[#allocation2 + $0x68] sm:$0xff]
        %v258 = vld [vmem:[#allocation2 + $0x70] sm:$0xff]
        %v259 = vld [vmem:[#allocation2 + $0x78] sm:$0xff]
        %v260 = vld [vmem:[#allocation2 + $0x80] sm:$0xff]
        %v261 = vld [vmem:[#allocation2 + $0x88] sm:$0xff]
        %262 = vrot.lane.b32.xlu0 %v242, 17
        %v263 = vpop.permute.xlu0 %262
        %264 = vrot.lane.b32.xlu0 %v243, 17
        %v265 = vpop.permute.xlu0 %264
        %v266 = vlaneseq
        %v267 = vand.u32 %v266, 127
        %vm268 = vcmp.lt.s32.totalorder %v267, 17
        %v269 = vsel %vm268, %v263, %v265
        %v270 = vsel %vm268, %v265, %v263
        %v271 = vmul.f32 %v270, %v244
        %v272 = vmul.f32 %v269, %v245
        %v273 = vadd.f32 %v271, 0.0
        %v274 = vadd.f32 %v272, 0.0
        %275 = vrot.lane.b32.xlu0 %v242, 16
        %v276 = vpop.permute.xlu0 %275
        %277 = vrot.lane.b32.xlu0 %v243, 16
        %v278 = vpop.permute.xlu0 %277
        %vm279 = vcmp.lt.s32.totalorder %v267, 16
        %v280 = vsel %vm279, %v276, %v278
        %v281 = vsel %vm279, %v278, %v276
        %v282 = vmul.f32 %v281, %v246
        %v283 = vmul.f32 %v280, %v247
        %v284 = vadd.f32 %v273, %v282
        %v285 = vadd.f32 %v274, %v283
        %286 = vrot.lane.b32.xlu0 %v242, 15
        %v287 = vpop.permute.xlu0 %286
        %288 = vrot.lane.b32.xlu0 %v243, 15
        %v289 = vpop.permute.xlu0 %288
        %vm290 = vcmp.lt.s32.totalorder %v267, 15
        %v291 = vsel %vm290, %v287, %v289
        %v292 = vsel %vm290, %v289, %v287
        %v293 = vmul.f32 %v292, %v248
        %v294 = vmul.f32 %v291, %v249
        %v295 = vadd.f32 %v284, %v293
        %v296 = vadd.f32 %v285, %v294
        %297 = vrot.lane.b32.xlu0 %v242, 1
        %v298 = vpop.permute.xlu0 %297
        %299 = vrot.lane.b32.xlu0 %v243, 1
        %v300 = vpop.permute.xlu0 %299
        %vm301 = vcmp.lt.s32.totalorder %v267, 1
        %v302 = vsel %vm301, %v298, %v300
        %v303 = vsel %vm301, %v300, %v298
        %v304 = vmul.f32 %v303, %v250
        %v305 = vmul.f32 %v302, %v251
        %v306 = vadd.f32 %v295, %v304
        %v307 = vadd.f32 %v296, %v305
        %v308 = vmul.f32 %v242, %v252
        %v309 = vmul.f32 %v243, %v253
        %v310 = vadd.f32 %v306, %v308
        %v311 = vadd.f32 %v307, %v309
        %312 = vrot.lane.b32.xlu0 %v242, 127
        %v313 = vpop.permute.xlu0 %312
        %314 = vrot.lane.b32.xlu0 %v243, 127
        %v315 = vpop.permute.xlu0 %314
        %vm316 = vcmp.lt.s32.totalorder %v267, 127
        %v317 = vsel %vm316, %v313, %v315
        %v318 = vsel %vm316, %v315, %v313
        %v319 = vmul.f32 %v317, %v254
        %v320 = vmul.f32 %v318, %v255
        %v321 = vadd.f32 %v310, %v319
        %v322 = vadd.f32 %v311, %v320
        %323 = vrot.lane.b32.xlu0 %v242, 113
        %v324 = vpop.permute.xlu0 %323
        %325 = vrot.lane.b32.xlu0 %v243, 113
        %v326 = vpop.permute.xlu0 %325
        %vm327 = vcmp.lt.s32.totalorder %v267, 113
        %v328 = vsel %vm327, %v324, %v326
        %v329 = vsel %vm327, %v326, %v324
        %v330 = vmul.f32 %v328, %v256
        %v331 = vmul.f32 %v329, %v257
        %v332 = vadd.f32 %v321, %v330
        %v333 = vadd.f32 %v322, %v331
        %334 = vrot.lane.b32.xlu0 %v242, 112
        %v335 = vpop.permute.xlu0 %334
        %336 = vrot.lane.b32.xlu0 %v243, 112
        %v337 = vpop.permute.xlu0 %336
        %vm338 = vcmp.lt.s32.totalorder %v267, 112
        %v339 = vsel %vm338, %v335, %v337
        %v340 = vsel %vm338, %v337, %v335
        %v341 = vmul.f32 %v339, %v258
        %v342 = vmul.f32 %v340, %v259
        %v343 = vadd.f32 %v332, %v341
        %v344 = vadd.f32 %v333, %v342
        %345 = vrot.lane.b32.xlu0 %v242, 111
        %v346 = vpop.permute.xlu0 %345
        %347 = vrot.lane.b32.xlu0 %v243, 111
        %v348 = vpop.permute.xlu0 %347
        %vm349 = vcmp.lt.s32.totalorder %v267, 111
        %v350 = vsel %vm349, %v346, %v348
        %v351 = vsel %vm349, %v348, %v346
        %v352 = vmul.f32 %v350, %v260
        %v353 = vmul.f32 %v351, %v261
        %v354 = vadd.f32 %v343, %v352
        %v355 = vadd.f32 %v344, %v353
        %v356 = vld [vmem:[%s2] sm:$0xff]
        %358 = vset.pattern.permute.xlu0 0
        %359 = vperm.xlu0 %358, %v356
        %v360 = vpop.permute.xlu0 %359
        %v362 = vadd.f32 %v354, %v360
        %v363 = vadd.f32 %v355, %v360
        %v364 = vadd.f32 %v362, 3.0
        %v365 = vadd.f32 %v363, 3.0
        %v366 = vmax.f32 %v364, 0.0
        %v367 = vmax.f32 %v365, 0.0
        %v368 = vmin.f32 %v366, 6.0
        %v369 = vmin.f32 %v367, 6.0
        %v370 = vmul.f32 %v362, %v368
        %v371 = vmul.f32 %v363, %v369
        %v372 = vmul.f32 %v370, 0.16666667
        %v373 = vmul.f32 %v371, 0.16666667
        %v374 = vpack.c.bf16 %v373, %v372
        %v375 = vld [vmem:[%s3] sm:$0xf]
        %v376 = vld [vmem:[%s3 + $0x4] sm:$0xf]
        %v377 = vld [vmem:[%s4] sm:$0xff]
        %v378 = vld [vmem:[%s4 + $0x8] sm:$0xff]
        %380 = vset.pattern.permute.xlu0 0
        %381 = vperm.xlu0 %380, %v377
        %v382 = vpop.permute.xlu0 %381
        %385 = vset.pattern.permute.xlu0 0
        %386 = vperm.xlu0 %385, %v378
        %v387 = vpop.permute.xlu0 %386
        %v391 = vunpack.c.l.b16 %v375
        %v392 = vunpack.c.l.b16 %v376
        %v393 = vpack.c.b16 %v392, %v391
        %v395 = vunpack.c.l.b16 %v374
        %v396 = vunpack.c.h.b16 %v374
        %v397 = vpack.c.b16 %v395, %v395
        %v398 = vpack.c.b16 %v396, %v396
        %vm399 = vcmask 64512
        %v401 = vsel %vm399, %v393, 0
        %vm403 = vcmask 1043456
        %v405 = vsel %vm403, %v397, 0
        %v408 = vsel %vm403, %v398, 0
        %410 = vmatpush.bf16.msra.mxu0 0
        %411 = vmatpush.bf16.msra.mxu0 0
        %412 = vmatpush.bf16.msra.mxu0 0
        %413 = vmatpush.bf16.msra.mxu0 0
        %414 = vmatpush.bf16.msra.mxu0 0
        %415 = vmatpush.bf16.msra.mxu0 0
        %416 = vmatpush.bf16.msra.mxu0 0
        %417 = vmatpush.bf16.msra.mxu0 %v405
        %418 = vmatmul.bf16.gmra.mxu0 %v401
        %v419 = vpop.f32.mrf.mxu0
        %v420 = vadd.f32 %v382, %v419
        %v421 = vpop.f32.mrf.mxu0
        %v422 = vadd.f32 %v387, %v421
        %423 = vdwg.mxu0
        %424 = vmatpush.bf16.msra.mxu0 0
        %425 = vmatpush.bf16.msra.mxu0 0
        %426 = vmatpush.bf16.msra.mxu0 0
        %427 = vmatpush.bf16.msra.mxu0 0
        %428 = vmatpush.bf16.msra.mxu0 0
        %429 = vmatpush.bf16.msra.mxu0 0
        %430 = vmatpush.bf16.msra.mxu0 0
        %431 = vmatpush.bf16.msra.mxu0 %v408
        %432 = vmatmul.bf16.gmra.mxu0 %v401
        %v433 = vpop.f32.mrf.mxu0
        %v434 = vadd.f32 %v382, %v433
        %v435 = vpop.f32.mrf.mxu0
        %v436 = vadd.f32 %v387, %v435
        %437 = vdwg.mxu0
        %v438 = vadd.f32 %v420, 3.0
        %v439 = vadd.f32 %v434, 3.0
        %v440 = vadd.f32 %v422, 3.0
        %v441 = vadd.f32 %v436, 3.0
        %v442 = vmax.f32 %v438, 0.0
        %v443 = vmax.f32 %v439, 0.0
        %v444 = vmax.f32 %v440, 0.0
        %v445 = vmax.f32 %v441, 0.0
        %v446 = vmin.f32 %v442, 6.0
        %v447 = vmin.f32 %v443, 6.0
        %v448 = vmin.f32 %v444, 6.0
        %v449 = vmin.f32 %v445, 6.0
        %v450 = vmul.f32 %v420, %v446
        %v451 = vmul.f32 %v434, %v447
        %v452 = vmul.f32 %v422, %v448
        %v453 = vmul.f32 %v436, %v449
        %v454 = vmul.f32 %v450, 0.16666667
        %v455 = vmul.f32 %v451, 0.16666667
        %v456 = vmul.f32 %v452, 0.16666667
        %v457 = vmul.f32 %v453, 0.16666667
        %458 = vst [vmem:[%s234] sm:$0xff] %v454
        %459 = vst [vmem:[%s234 + $0x8] sm:$0xff] %v455
        %460 = vst [vmem:[%s234 + $0x10] sm:$0xff] %v456
        %461 = vst [vmem:[%s234 + $0x18] sm:$0xff] %v457
        %s462 = sand.u32 %s138, 1
        %s463 = scalar_lea.sflag [#allocation4], %s462
        %s464 = sand.u32 %s138, 1
        %s465 = smul.addr %s464, 32
        %s466 = scalar_lea.vmem [#allocation5], %s465
        // Predicated region
        $region45: #{tpu_custom_call.1} parent=39 // pred_check
          %p467 = pneg %p148
        $region46: #{tpu_custom_call.1} parent=39 // pred_check_branch
          %469 = sbr.rel (%p467) target = $region48
        $region47: #{tpu_custom_call.1} parent=39 // pred_region
          %471 = vsyncadd %s463, 0
          %s472 = smul.addr %s20, 4
          %s473 = smul.addr %s472, 8
          %s474 = scalar_lea.hbm %s5, %s473
          %s475 = sshll.u32 %s466, 4
          %s476 = int_to_ptr.vmem [resolvable:$true] %s475
          %s477 = sshll.u32 %s474, 4
          %s478 = int_to_ptr.hbm [resolvable:$true] %s477
          %483 = dma.vmem_to_hbm [thread:$0]  %s476, 512, %s478, %s463, 256, 256, 16
        $region48: #{tpu_custom_call.1} parent=39 // pred_fallthru
          _
      $region40: #{tpu_custom_call.1} parent=5 // pred_fallthru
        _
      %p484 = scmp.le.s32.totalorder 2, %s15
      // Predicated region
      $region49: #{tpu_custom_call.1} parent=5 // pred_check
        %p485 = pneg %p484
      $region50: #{tpu_custom_call.1} parent=5 // pred_check_branch
        %487 = sbr.rel (%p485) target = $region52
      $region51: #{tpu_custom_call.1} parent=5 // pred_region
        %s488 = ssub.s32 %s15, 2
        // Predicated region
        $region53: #{tpu_custom_call.1} parent=51 // pred_check
          %p489 = pneg %p154
        $region54: #{tpu_custom_call.1} parent=51 // pred_check_branch
          %491 = sbr.rel (%p489) target = $region56
        $region55: #{tpu_custom_call.1} parent=51 // pred_region
          %s492 = sand.u32 %s139, 1
          %s493 = scalar_lea.sflag [#allocation4], %s492
          %s494 = sand.u32 %s139, 1
          %s495 = smul.addr %s494, 32
          %s496 = scalar_lea.vmem [#allocation5], %s495
          %498 = dma.done %s493, 512
        $region56: #{tpu_custom_call.1} parent=51 // pred_fallthru
          _
      $region52: #{tpu_custom_call.1} parent=5 // pred_fallthru
        _
    $region6: #{tpu_custom_call.1} parent=1 // loop_footer
      %s19 = sadd.s32 1, %s15
    $region7: #{tpu_custom_call.1} parent=1 // loop_footer_branch
      %14 = sbr.rel target = $region3
    $region8: #{tpu_custom_call.1} parent=1 // loop_exit
      _
    %499 = vsyncpa [#allocation3], 1
    %s500 = scalar_lea.sflag [#allocation3], 1
    %501 = vsyncpa %s500, 1
    %502 = vsyncpa [#allocation4], 1
    %s503 = scalar_lea.sflag [#allocation4], 1
    %504 = vsyncpa %s503, 1

</llo_original>
